<compile_context>
chip_gen: v6e
topology: v6e:2x2x1
jax: 0.10.0
libtpu: 0.0.40
codegen_flags: <defaults>
</compile_context>

<pallas_src>
import functools

import jax
import jax.numpy as jnp
from jax.experimental import pallas as pl
from jax.experimental.pallas import tpu as pltpu


def _leaky_relu(x, slope=0.2):
    return jnp.where(x > 0, x, slope * x)


def _round_up(x, m):
    return (x + m - 1) // m * m


def _small_k_affine(x, w_ref, b_ref):
    """y = x @ W + b for tiny K (2-3), computed on the VPU.

    Each jnp.dot would add a full MXU push+drain round-trip to a strictly
    serial dependency chain, so with K <= 3 we unroll into 2-3 broadcast
    multiply-adds instead (lane-broadcast of x columns, sublane-broadcast of
    weight rows / bias). Only the first K columns of x are read, so x may be
    lane-padded wider than K."""
    k_dim = w_ref.shape[0]
    w = w_ref[...]
    acc = b_ref[...] + x[:, 0:1] * w[0:1, :]
    for k in range(1, k_dim):
        acc = acc + x[:, k:k + 1] * w[k:k + 1, :]
    return acc


def vae_fwd_kernel(
    x_ref, eps_ref,
    w_e1_ref, b_e1_ref,        # encoder Linear(input_dim -> hidden_dim)      (MXU)
    w_e2_ref, b_e2_ref,        # encoder Linear(hidden_dim -> latent_pad)     (MXU, cols zero-padded)
    w_head_ref, b_head_ref,    # fused [mean | logvar] Linear(latent_dim -> 4) (VPU)
    w_mv_ref, b_mv_ref,        # mean_var_decoder Linear(2 -> latent_dim)     (VPU)
    w_d1_ref, b_d1_ref,        # decoder Linear(latent_dim -> hidden_dim)     (VPU)
    w_d2_ref, b_d2_ref,        # decoder Linear(hidden_dim -> input_dim)      (MXU)
    out_ref,                   # packed [x_hat | mean | logvar | zeros], lane-dense
    *, input_dim,
):
    x = x_ref[...]

    # ---- encoder L1 (MXU; optionally bf16 operands, f32 accumulate) ----
    h = jnp.dot(x.astype(w_e1_ref.dtype), w_e1_ref[...],
                preferred_element_type=jnp.float32) + b_e1_ref[...]
    h = _leaky_relu(h)

    # ---- encoder L2 (MXU; lane-padded output, real latents in cols [0:3]) ----
    h = jnp.dot(h, w_e2_ref[...], preferred_element_type=jnp.float32) + b_e2_ref[...]
    h = _leaky_relu(h)

    # ---- fused mean | logvar heads (VPU, K = latent_dim) ----
    head = _small_k_affine(h, w_head_ref, b_head_ref)      # [B, 4]
    mean = head[:, 0:2]
    logvar = head[:, 2:4]

    # ---- reparameterization (matches PyTorch module: z = mean + logvar * eps) ----
    z = mean + logvar * eps_ref[...]

    # ---- mean_var_decoder (VPU, K = 2) ----
    d = _leaky_relu(_small_k_affine(z, w_mv_ref, b_mv_ref))

    # ---- decoder L1 (VPU, K = latent_dim) ----
    d = _leaky_relu(_small_k_affine(d, w_d1_ref, b_d1_ref))

    # ---- decoder L2 (MXU; optionally bf16 operands, f32 accumulate) ----
    d = jnp.dot(d.astype(w_d2_ref.dtype), w_d2_ref[...],
                preferred_element_type=jnp.float32) + b_d2_ref[...]
    x_hat = jax.nn.sigmoid(d)

    # ---- single packed, lane-dense output buffer ----
    out_ref[:, 0:input_dim] = x_hat.astype(out_ref.dtype)
    out_ref[:, input_dim:input_dim + 4] = head.astype(out_ref.dtype)
    pad = out_ref.shape[1] - (input_dim + 4)
    if pad > 0:
        out_ref[:, input_dim + 4:] = jnp.zeros((x.shape[0], pad), out_ref.dtype)


def vae_forward(x, eps, params, *, block_b=None, matmul_dtype=jnp.bfloat16):
    """Run the full VAE forward in one Pallas kernel, gridded over batch.

    params: list of (W, b) with W as [in_features, out_features] and
    b as [1, out_features], in the order:
    encoder L1, encoder L2, mean_layer, logvar_layer, mean_var_decoder,
    decoder L1, decoder L2.
    Pass matmul_dtype=jnp.float32 for exact f32 matmuls.
    """
    batch, input_dim = x.shape
    (w_e1, b_e1), (w_e2, b_e2), (w_mu, b_mu), (w_lv, b_lv), \
        (w_mv, b_mv), (w_d1, b_d1), (w_d2, b_d2) = params
    latent_dim = w_e2.shape[1]

    # Fuse the two parallel heads into a single [latent_dim, 4] affine.
    w_head = jnp.concatenate([w_mu, w_lv], axis=1)
    b_head = jnp.concatenate([b_mu, b_lv], axis=1)

    # Zero-pad encoder L2's output columns to a full lane tile (128) so the
    # MXU result and the following elementwise ops are lane-dense; the padded
    # latent columns are zeros and never read by the small-K affines.
    latent_pad = _round_up(latent_dim, 128)
    w_e2p = jnp.pad(w_e2, ((0, 0), (0, latent_pad - latent_dim)))
    b_e2p = jnp.pad(b_e2, ((0, 0), (0, latent_pad - latent_dim)))

    # Only the two real matmuls (input<->hidden) get reduced-precision
    # operands; accumulation and all elementwise math stay f32.
    w_e1 = w_e1.astype(matmul_dtype)
    w_d2 = w_d2.astype(matmul_dtype)

    flat = [w_e1, b_e1, w_e2p, b_e2p, w_head, b_head,
            w_mv, b_mv, w_d1, b_d1, w_d2, b_d2]

    # Batch tiling: parallel grid over batch blocks (both TCs on v7x, and the
    # BlockSpec pipeline double-buffers the x / eps / output DMAs).
    if block_b is None:
        block_b = min(_round_up(batch, 8), 128)
    padded_batch = _round_up(batch, block_b)
    if padded_batch != batch:
        x = jnp.pad(x, ((0, padded_batch - batch), (0, 0)))
        eps = jnp.pad(eps, ((0, padded_batch - batch), (0, 0)))
    grid = (padded_batch // block_b,)

    # Lane-dense packed output: [x_hat | mean | logvar | zero pad] -> mult of 128.
    out_width = _round_up(input_dim + 4, 128)

    def batch_spec(width):
        return pl.BlockSpec((block_b, width), lambda i: (i, 0))

    def whole_spec(arr):
        return pl.BlockSpec(arr.shape, lambda i: (0, 0))

    in_specs = [batch_spec(input_dim), batch_spec(2)] + [whole_spec(a) for a in flat]

    packed = pl.pallas_call(
        functools.partial(vae_fwd_kernel, input_dim=input_dim),
        out_shape=jax.ShapeDtypeStruct((padded_batch, out_width), jnp.float32),
        grid=grid,
        in_specs=in_specs,
        out_specs=batch_spec(out_width),
        compiler_params=pltpu.CompilerParams(
            dimension_semantics=("parallel",)),
    )(x, eps, *flat)

    x_hat = packed[:batch, :input_dim]
    mean = packed[:batch, input_dim:input_dim + 2]
    logvar = packed[:batch, input_dim + 2:input_dim + 4]
    return x_hat, mean, logvar


def init_linear(key, in_dim, out_dim):
    """Deterministic PyTorch-like init: U(-1/sqrt(in), 1/sqrt(in))."""
    kw, kb = jax.random.split(key)
    bound = 1.0 / jnp.sqrt(jnp.float32(in_dim))
    w = jax.random.uniform(kw, (in_dim, out_dim), jnp.float32, -bound, bound)
    b = jax.random.uniform(kb, (1, out_dim), jnp.float32, -bound, bound)
    return w, b


def reference_forward(x, eps, params):
    """Plain-JAX f32 reference for sanity checking."""
    (w_e1, b_e1), (w_e2, b_e2), (w_mu, b_mu), (w_lv, b_lv), \
        (w_mv, b_mv), (w_d1, b_d1), (w_d2, b_d2) = params
    h = _leaky_relu(x @ w_e1 + b_e1)
    h = _leaky_relu(h @ w_e2 + b_e2)
    mean = h @ w_mu + b_mu
    logvar = h @ w_lv + b_lv
    z = mean + logvar * eps
    d = _leaky_relu(z @ w_mv + b_mv)
    d = _leaky_relu(d @ w_d1 + b_d1)
    x_hat = jax.nn.sigmoid(d @ w_d2 + b_d2)
    return x_hat, mean, logvar


if __name__ == "__main__":
    # Small shapes consistent with the module (input_dim free, latent_dim=3).
    batch = 16
    input_dim = 32
    hidden_dim = 64
    latent_dim = 3

    key = jax.random.PRNGKey(0)
    keys = jax.random.split(key, 9)

    params = [
        init_linear(keys[0], input_dim, hidden_dim),   # encoder L1
        init_linear(keys[1], hidden_dim, latent_dim),  # encoder L2
        init_linear(keys[2], latent_dim, 2),           # mean_layer
        init_linear(keys[3], latent_dim, 2),           # logvar_layer
        init_linear(keys[4], 2, latent_dim),           # mean_var_decoder
        init_linear(keys[5], latent_dim, hidden_dim),  # decoder L1
        init_linear(keys[6], hidden_dim, input_dim),   # decoder L2
    ]

    x = jax.random.normal(keys[7], (batch, input_dim), jnp.float32)
    # TODO(synk): torch.randn_like happens inside the module; here epsilon is
    # generated outside the kernel (deterministic via PRNGKey) and passed in.
    eps = jax.random.normal(keys[8], (batch, 2), jnp.float32)

    xr, mr, lr = reference_forward(x, eps, params)

    # Default path: bf16 MXU operands, f32 accumulate + f32 elementwise.
    # block_b=8 -> 2 batch blocks, exercising the parallel grid.
    x_hat, mean, logvar = vae_forward(x, eps, params, block_b=8)
    jax.block_until_ready((x_hat, mean, logvar))

    assert x_hat.shape == (batch, input_dim)
    assert mean.shape == (batch, 2) and logvar.shape == (batch, 2)
    assert jnp.allclose(x_hat, xr, atol=2e-2, rtol=2e-2), "x_hat mismatch"
    assert jnp.allclose(mean, mr, atol=2e-2, rtol=2e-2), "mean mismatch"
    assert jnp.allclose(logvar, lr, atol=2e-2, rtol=2e-2), "logvar mismatch"

    print("KERNEL_OK")
</pallas_src>

<mosaic_0001>
module attributes {stable_mosaic.version = 11 : i64} {
  func.func @vae_fwd_kernel(%arg0: i32, %arg1: memref<8x32xf32, #tpu.memory_space<vmem>>, %arg2: memref<8x2xf32, #tpu.memory_space<vmem>>, %arg3: memref<32x64xbf16, #tpu.memory_space<vmem>>, %arg4: memref<1x64xf32, #tpu.memory_space<vmem>>, %arg5: memref<64x128xf32, #tpu.memory_space<vmem>>, %arg6: memref<1x128xf32, #tpu.memory_space<vmem>>, %arg7: memref<3x4xf32, #tpu.memory_space<vmem>>, %arg8: memref<1x4xf32, #tpu.memory_space<vmem>>, %arg9: memref<2x3xf32, #tpu.memory_space<vmem>>, %arg10: memref<1x3xf32, #tpu.memory_space<vmem>>, %arg11: memref<3x64xf32, #tpu.memory_space<vmem>>, %arg12: memref<1x64xf32, #tpu.memory_space<vmem>>, %arg13: memref<64x32xbf16, #tpu.memory_space<vmem>>, %arg14: memref<1x32xf32, #tpu.memory_space<vmem>>, %arg15: memref<8x128xf32, #tpu.memory_space<vmem>>) attributes {dimension_semantics = [#tpu.dimension_semantics<parallel>], iteration_bounds = array<i64: 2>, scalar_prefetch = 0 : i64, scratch_operands = 0 : i64, tpu.core_type = #tpu.core_type<tc>, window_params = [{transform_indices = @transform_0, window_bounds = array<i64: 8, 32>}, {transform_indices = @transform_1, window_bounds = array<i64: 8, 2>}, {pipeline_mode = #tpu.pipeline_mode<synchronous>, transform_indices = @transform_2, window_bounds = array<i64: 32, 64>}, {pipeline_mode = #tpu.pipeline_mode<synchronous>, transform_indices = @transform_3, window_bounds = array<i64: 1, 64>}, {pipeline_mode = #tpu.pipeline_mode<synchronous>, transform_indices = @transform_4, window_bounds = array<i64: 64, 128>}, {pipeline_mode = #tpu.pipeline_mode<synchronous>, transform_indices = @transform_5, window_bounds = array<i64: 1, 128>}, {pipeline_mode = #tpu.pipeline_mode<synchronous>, transform_indices = @transform_6, window_bounds = array<i64: 3, 4>}, {pipeline_mode = #tpu.pipeline_mode<synchronous>, transform_indices = @transform_7, window_bounds = array<i64: 1, 4>}, {pipeline_mode = #tpu.pipeline_mode<synchronous>, transform_indices = @transform_8, window_bounds = array<i64: 2, 3>}, {pipeline_mode = #tpu.pipeline_mode<synchronous>, transform_indices = @transform_9, window_bounds = array<i64: 1, 3>}, {pipeline_mode = #tpu.pipeline_mode<synchronous>, transform_indices = @transform_10, window_bounds = array<i64: 3, 64>}, {pipeline_mode = #tpu.pipeline_mode<synchronous>, transform_indices = @transform_11, window_bounds = array<i64: 1, 64>}, {pipeline_mode = #tpu.pipeline_mode<synchronous>, transform_indices = @transform_12, window_bounds = array<i64: 64, 32>}, {pipeline_mode = #tpu.pipeline_mode<synchronous>, transform_indices = @transform_13, window_bounds = array<i64: 1, 32>}, {transform_indices = @transform_14, window_bounds = array<i64: 8, 128>}]} {
    %c0 = arith.constant 0 : index
    %c0_0 = arith.constant 0 : index
    %0 = vector.load %arg1[%c0, %c0_0] : memref<8x32xf32, #tpu.memory_space<vmem>>, vector<8x32xf32>
    %1 = arith.truncf %0 : vector<8x32xf32> to vector<8x32xbf16>
    %c0_1 = arith.constant 0 : index
    %c0_2 = arith.constant 0 : index
    %2 = vector.load %arg3[%c0_1, %c0_2] : memref<32x64xbf16, #tpu.memory_space<vmem>>, vector<32x64xbf16>
    %cst = arith.constant dense<0.000000e+00> : vector<8x64xf32>
    %3 = tpu.matmul %1, %2, %cst {dimension_numbers = #tpu.dot_dimension_numbers<[1], [0], [0], [1], [0, 0, 1, 1], [], []>} : vector<8x32xbf16>, vector<32x64xbf16>, vector<8x64xf32> -> vector<8x64xf32>
    %c0_3 = arith.constant 0 : index
    %c0_4 = arith.constant 0 : index
    %4 = vector.load %arg4[%c0_3, %c0_4] : memref<1x64xf32, #tpu.memory_space<vmem>>, vector<1x64xf32>
    %5 = vector.broadcast %4 : vector<1x64xf32> to vector<8x64xf32>
    %6 = arith.addf %3, %5 : vector<8x64xf32>
    %cst_5 = arith.constant 0.000000e+00 : f32
    %7 = vector.broadcast %cst_5 : f32 to vector<8x64xf32>
    %8 = arith.cmpf ogt, %6, %7 : vector<8x64xf32>
    %cst_6 = arith.constant 2.000000e-01 : f32
    %9 = vector.broadcast %cst_6 : f32 to vector<8x64xf32>
    %10 = arith.mulf %9, %6 : vector<8x64xf32>
    %11 = arith.select %8, %6, %10 : vector<8x64xi1>, vector<8x64xf32>
    %c0_7 = arith.constant 0 : index
    %c0_8 = arith.constant 0 : index
    %12 = vector.load %arg5[%c0_7, %c0_8] : memref<64x128xf32, #tpu.memory_space<vmem>>, vector<64x128xf32>
    %cst_9 = arith.constant dense<0.000000e+00> : vector<8x128xf32>
    %13 = tpu.matmul %11, %12, %cst_9 {dimension_numbers = #tpu.dot_dimension_numbers<[1], [0], [0], [1], [0, 0, 1, 1], [], []>} : vector<8x64xf32>, vector<64x128xf32>, vector<8x128xf32> -> vector<8x128xf32>
    %c0_10 = arith.constant 0 : index
    %c0_11 = arith.constant 0 : index
    %14 = vector.load %arg6[%c0_10, %c0_11] : memref<1x128xf32, #tpu.memory_space<vmem>>, vector<1x128xf32>
    %15 = vector.broadcast %14 : vector<1x128xf32> to vector<8x128xf32>
    %16 = arith.addf %13, %15 : vector<8x128xf32>
    %cst_12 = arith.constant 0.000000e+00 : f32
    %17 = vector.broadcast %cst_12 : f32 to vector<8x128xf32>
    %18 = arith.cmpf ogt, %16, %17 : vector<8x128xf32>
    %cst_13 = arith.constant 2.000000e-01 : f32
    %19 = vector.broadcast %cst_13 : f32 to vector<8x128xf32>
    %20 = arith.mulf %19, %16 : vector<8x128xf32>
    %21 = arith.select %18, %16, %20 : vector<8x128xi1>, vector<8x128xf32>
    %c0_14 = arith.constant 0 : index
    %c0_15 = arith.constant 0 : index
    %22 = vector.load %arg7[%c0_14, %c0_15] : memref<3x4xf32, #tpu.memory_space<vmem>>, vector<3x4xf32>
    %c0_16 = arith.constant 0 : index
    %c0_17 = arith.constant 0 : index
    %23 = vector.load %arg8[%c0_16, %c0_17] : memref<1x4xf32, #tpu.memory_space<vmem>>, vector<1x4xf32>
    %24 = vector.extract_strided_slice %21 {offsets = [0, 0], sizes = [8, 1], strides = [1, 1]} : vector<8x128xf32> to vector<8x1xf32>
    %25 = vector.extract_strided_slice %22 {offsets = [0, 0], sizes = [1, 4], strides = [1, 1]} : vector<3x4xf32> to vector<1x4xf32>
    %26 = vector.broadcast %24 : vector<8x1xf32> to vector<8x4xf32>
    %27 = vector.broadcast %25 : vector<1x4xf32> to vector<8x4xf32>
    %28 = arith.mulf %26, %27 : vector<8x4xf32>
    %29 = vector.broadcast %23 : vector<1x4xf32> to vector<8x4xf32>
    %30 = arith.addf %29, %28 : vector<8x4xf32>
    %31 = vector.extract_strided_slice %21 {offsets = [0, 1], sizes = [8, 1], strides = [1, 1]} : vector<8x128xf32> to vector<8x1xf32>
    %32 = vector.extract_strided_slice %22 {offsets = [1, 0], sizes = [1, 4], strides = [1, 1]} : vector<3x4xf32> to vector<1x4xf32>
    %33 = vector.broadcast %31 : vector<8x1xf32> to vector<8x4xf32>
    %34 = vector.broadcast %32 : vector<1x4xf32> to vector<8x4xf32>
    %35 = arith.mulf %33, %34 : vector<8x4xf32>
    %36 = arith.addf %30, %35 : vector<8x4xf32>
    %37 = vector.extract_strided_slice %21 {offsets = [0, 2], sizes = [8, 1], strides = [1, 1]} : vector<8x128xf32> to vector<8x1xf32>
    %38 = vector.extract_strided_slice %22 {offsets = [2, 0], sizes = [1, 4], strides = [1, 1]} : vector<3x4xf32> to vector<1x4xf32>
    %39 = vector.broadcast %37 : vector<8x1xf32> to vector<8x4xf32>
    %40 = vector.broadcast %38 : vector<1x4xf32> to vector<8x4xf32>
    %41 = arith.mulf %39, %40 : vector<8x4xf32>
    %42 = arith.addf %36, %41 : vector<8x4xf32>
    %43 = vector.extract_strided_slice %42 {offsets = [0, 0], sizes = [8, 2], strides = [1, 1]} : vector<8x4xf32> to vector<8x2xf32>
    %44 = vector.extract_strided_slice %42 {offsets = [0, 2], sizes = [8, 2], strides = [1, 1]} : vector<8x4xf32> to vector<8x2xf32>
    %c0_18 = arith.constant 0 : index
    %c0_19 = arith.constant 0 : index
    %45 = vector.load %arg2[%c0_18, %c0_19] : memref<8x2xf32, #tpu.memory_space<vmem>>, vector<8x2xf32>
    %46 = arith.mulf %44, %45 : vector<8x2xf32>
    %47 = arith.addf %43, %46 : vector<8x2xf32>
    %c0_20 = arith.constant 0 : index
    %c0_21 = arith.constant 0 : index
    %48 = vector.load %arg9[%c0_20, %c0_21] : memref<2x3xf32, #tpu.memory_space<vmem>>, vector<2x3xf32>
    %c0_22 = arith.constant 0 : index
    %c0_23 = arith.constant 0 : index
    %49 = vector.load %arg10[%c0_22, %c0_23] : memref<1x3xf32, #tpu.memory_space<vmem>>, vector<1x3xf32>
    %50 = vector.extract_strided_slice %47 {offsets = [0, 0], sizes = [8, 1], strides = [1, 1]} : vector<8x2xf32> to vector<8x1xf32>
    %51 = vector.extract_strided_slice %48 {offsets = [0, 0], sizes = [1, 3], strides = [1, 1]} : vector<2x3xf32> to vector<1x3xf32>
    %52 = vector.broadcast %50 : vector<8x1xf32> to vector<8x3xf32>
    %53 = vector.broadcast %51 : vector<1x3xf32> to vector<8x3xf32>
    %54 = arith.mulf %52, %53 : vector<8x3xf32>
    %55 = vector.broadcast %49 : vector<1x3xf32> to vector<8x3xf32>
    %56 = arith.addf %55, %54 : vector<8x3xf32>
    %57 = vector.extract_strided_slice %47 {offsets = [0, 1], sizes = [8, 1], strides = [1, 1]} : vector<8x2xf32> to vector<8x1xf32>
    %58 = vector.extract_strided_slice %48 {offsets = [1, 0], sizes = [1, 3], strides = [1, 1]} : vector<2x3xf32> to vector<1x3xf32>
    %59 = vector.broadcast %57 : vector<8x1xf32> to vector<8x3xf32>
    %60 = vector.broadcast %58 : vector<1x3xf32> to vector<8x3xf32>
    %61 = arith.mulf %59, %60 : vector<8x3xf32>
    %62 = arith.addf %56, %61 : vector<8x3xf32>
    %cst_24 = arith.constant 0.000000e+00 : f32
    %63 = vector.broadcast %cst_24 : f32 to vector<8x3xf32>
    %64 = arith.cmpf ogt, %62, %63 : vector<8x3xf32>
    %cst_25 = arith.constant 2.000000e-01 : f32
    %65 = vector.broadcast %cst_25 : f32 to vector<8x3xf32>
    %66 = arith.mulf %65, %62 : vector<8x3xf32>
    %67 = arith.select %64, %62, %66 : vector<8x3xi1>, vector<8x3xf32>
    %c0_26 = arith.constant 0 : index
    %c0_27 = arith.constant 0 : index
    %68 = vector.load %arg11[%c0_26, %c0_27] : memref<3x64xf32, #tpu.memory_space<vmem>>, vector<3x64xf32>
    %c0_28 = arith.constant 0 : index
    %c0_29 = arith.constant 0 : index
    %69 = vector.load %arg12[%c0_28, %c0_29] : memref<1x64xf32, #tpu.memory_space<vmem>>, vector<1x64xf32>
    %70 = vector.extract_strided_slice %67 {offsets = [0, 0], sizes = [8, 1], strides = [1, 1]} : vector<8x3xf32> to vector<8x1xf32>
    %71 = vector.extract_strided_slice %68 {offsets = [0, 0], sizes = [1, 64], strides = [1, 1]} : vector<3x64xf32> to vector<1x64xf32>
    %72 = vector.broadcast %70 : vector<8x1xf32> to vector<8x64xf32>
    %73 = vector.broadcast %71 : vector<1x64xf32> to vector<8x64xf32>
    %74 = arith.mulf %72, %73 : vector<8x64xf32>
    %75 = vector.broadcast %69 : vector<1x64xf32> to vector<8x64xf32>
    %76 = arith.addf %75, %74 : vector<8x64xf32>
    %77 = vector.extract_strided_slice %67 {offsets = [0, 1], sizes = [8, 1], strides = [1, 1]} : vector<8x3xf32> to vector<8x1xf32>
    %78 = vector.extract_strided_slice %68 {offsets = [1, 0], sizes = [1, 64], strides = [1, 1]} : vector<3x64xf32> to vector<1x64xf32>
    %79 = vector.broadcast %77 : vector<8x1xf32> to vector<8x64xf32>
    %80 = vector.broadcast %78 : vector<1x64xf32> to vector<8x64xf32>
    %81 = arith.mulf %79, %80 : vector<8x64xf32>
    %82 = arith.addf %76, %81 : vector<8x64xf32>
    %83 = vector.extract_strided_slice %67 {offsets = [0, 2], sizes = [8, 1], strides = [1, 1]} : vector<8x3xf32> to vector<8x1xf32>
    %84 = vector.extract_strided_slice %68 {offsets = [2, 0], sizes = [1, 64], strides = [1, 1]} : vector<3x64xf32> to vector<1x64xf32>
    %85 = vector.broadcast %83 : vector<8x1xf32> to vector<8x64xf32>
    %86 = vector.broadcast %84 : vector<1x64xf32> to vector<8x64xf32>
    %87 = arith.mulf %85, %86 : vector<8x64xf32>
    %88 = arith.addf %82, %87 : vector<8x64xf32>
    %cst_30 = arith.constant 0.000000e+00 : f32
    %89 = vector.broadcast %cst_30 : f32 to vector<8x64xf32>
    %90 = arith.cmpf ogt, %88, %89 : vector<8x64xf32>
    %cst_31 = arith.constant 2.000000e-01 : f32
    %91 = vector.broadcast %cst_31 : f32 to vector<8x64xf32>
    %92 = arith.mulf %91, %88 : vector<8x64xf32>
    %93 = arith.select %90, %88, %92 : vector<8x64xi1>, vector<8x64xf32>
    %94 = arith.truncf %93 : vector<8x64xf32> to vector<8x64xbf16>
    %c0_32 = arith.constant 0 : index
    %c0_33 = arith.constant 0 : index
    %95 = vector.load %arg13[%c0_32, %c0_33] : memref<64x32xbf16, #tpu.memory_space<vmem>>, vector<64x32xbf16>
    %cst_34 = arith.constant dense<0.000000e+00> : vector<8x32xf32>
    %96 = tpu.matmul %94, %95, %cst_34 {dimension_numbers = #tpu.dot_dimension_numbers<[1], [0], [0], [1], [0, 0, 1, 1], [], []>} : vector<8x64xbf16>, vector<64x32xbf16>, vector<8x32xf32> -> vector<8x32xf32>
    %c0_35 = arith.constant 0 : index
    %c0_36 = arith.constant 0 : index
    %97 = vector.load %arg14[%c0_35, %c0_36] : memref<1x32xf32, #tpu.memory_space<vmem>>, vector<1x32xf32>
    %98 = vector.broadcast %97 : vector<1x32xf32> to vector<8x32xf32>
    %99 = arith.addf %96, %98 : vector<8x32xf32>
    %100 = arith.negf %99 : vector<8x32xf32>
    %101 = math.exp %100 : vector<8x32xf32>
    %cst_37 = arith.constant 1.000000e+00 : f32
    %102 = vector.broadcast %cst_37 : f32 to vector<8x32xf32>
    %103 = arith.addf %102, %101 : vector<8x32xf32>
    %104 = arith.divf %102, %103 : vector<8x32xf32>
    %c0_38 = arith.constant 0 : index
    %c0_39 = arith.constant 0 : index
    %105 = vector.load %arg15[%c0_38, %c0_39] : memref<8x128xf32, #tpu.memory_space<vmem>>, vector<8x32xf32>
    tpu.vector_store %arg15[%c0_38, %c0_39], %104 {strides = array<i32>} : memref<8x128xf32, #tpu.memory_space<vmem>>, vector<8x32xf32>,
    %c0_40 = arith.constant 0 : index
    %c32 = arith.constant 32 : index
    %106 = vector.load %arg15[%c0_40, %c32] : memref<8x128xf32, #tpu.memory_space<vmem>>, vector<8x4xf32>
    tpu.vector_store %arg15[%c0_40, %c32], %42 {strides = array<i32>} : memref<8x128xf32, #tpu.memory_space<vmem>>, vector<8x4xf32>,
    %cst_41 = arith.constant 0.000000e+00 : f32
    %107 = vector.broadcast %cst_41 : f32 to vector<8x92xf32>
    %c0_42 = arith.constant 0 : index
    %c36 = arith.constant 36 : index
    %108 = vector.load %arg15[%c0_42, %c36] : memref<8x128xf32, #tpu.memory_space<vmem>>, vector<8x92xf32>
    tpu.vector_store %arg15[%c0_42, %c36], %107 {strides = array<i32>} : memref<8x128xf32, #tpu.memory_space<vmem>>, vector<8x92xf32>,
    return
  }
  func.func @transform_0(%arg0: i32) -> (i32, i32) {
    %c0_i32 = arith.constant 0 : i32
    %c0_i32_0 = arith.constant 0 : i32
    return %arg0, %c0_i32 : i32, i32
  }
  func.func @transform_1(%arg0: i32) -> (i32, i32) {
    %c0_i32 = arith.constant 0 : i32
    %c0_i32_0 = arith.constant 0 : i32
    return %arg0, %c0_i32 : i32, i32
  }
  func.func @transform_2(%arg0: i32) -> (i32, i32) {
    %c0_i32 = arith.constant 0 : i32
    %c0_i32_0 = arith.constant 0 : i32
    %c0_i32_1 = arith.constant 0 : i32
    return %c0_i32, %c0_i32_0 : i32, i32
  }
  func.func @transform_3(%arg0: i32) -> (i32, i32) {
    %c0_i32 = arith.constant 0 : i32
    %c0_i32_0 = arith.constant 0 : i32
    %c0_i32_1 = arith.constant 0 : i32
    return %c0_i32, %c0_i32_0 : i32, i32
  }
  func.func @transform_4(%arg0: i32) -> (i32, i32) {
    %c0_i32 = arith.constant 0 : i32
    %c0_i32_0 = arith.constant 0 : i32
    %c0_i32_1 = arith.constant 0 : i32
    return %c0_i32, %c0_i32_0 : i32, i32
  }
  func.func @transform_5(%arg0: i32) -> (i32, i32) {
    %c0_i32 = arith.constant 0 : i32
    %c0_i32_0 = arith.constant 0 : i32
    %c0_i32_1 = arith.constant 0 : i32
    return %c0_i32, %c0_i32_0 : i32, i32
  }
  func.func @transform_6(%arg0: i32) -> (i32, i32) {
    %c0_i32 = arith.constant 0 : i32
    %c0_i32_0 = arith.constant 0 : i32
    %c0_i32_1 = arith.constant 0 : i32
    return %c0_i32, %c0_i32_0 : i32, i32
  }
  func.func @transform_7(%arg0: i32) -> (i32, i32) {
    %c0_i32 = arith.constant 0 : i32
    %c0_i32_0 = arith.constant 0 : i32
    %c0_i32_1 = arith.constant 0 : i32
    return %c0_i32, %c0_i32_0 : i32, i32
  }
  func.func @transform_8(%arg0: i32) -> (i32, i32) {
    %c0_i32 = arith.constant 0 : i32
    %c0_i32_0 = arith.constant 0 : i32
    %c0_i32_1 = arith.constant 0 : i32
    return %c0_i32, %c0_i32_0 : i32, i32
  }
  func.func @transform_9(%arg0: i32) -> (i32, i32) {
    %c0_i32 = arith.constant 0 : i32
    %c0_i32_0 = arith.constant 0 : i32
    %c0_i32_1 = arith.constant 0 : i32
    return %c0_i32, %c0_i32_0 : i32, i32
  }
  func.func @transform_10(%arg0: i32) -> (i32, i32) {
    %c0_i32 = arith.constant 0 : i32
    %c0_i32_0 = arith.constant 0 : i32
    %c0_i32_1 = arith.constant 0 : i32
    return %c0_i32, %c0_i32_0 : i32, i32
  }
  func.func @transform_11(%arg0: i32) -> (i32, i32) {
    %c0_i32 = arith.constant 0 : i32
    %c0_i32_0 = arith.constant 0 : i32
    %c0_i32_1 = arith.constant 0 : i32
    return %c0_i32, %c0_i32_0 : i32, i32
  }
  func.func @transform_12(%arg0: i32) -> (i32, i32) {
    %c0_i32 = arith.constant 0 : i32
    %c0_i32_0 = arith.constant 0 : i32
    %c0_i32_1 = arith.constant 0 : i32
    return %c0_i32, %c0_i32_0 : i32, i32
  }
  func.func @transform_13(%arg0: i32) -> (i32, i32) {
    %c0_i32 = arith.constant 0 : i32
    %c0_i32_0 = arith.constant 0 : i32
    %c0_i32_1 = arith.constant 0 : i32
    return %c0_i32, %c0_i32_0 : i32, i32
  }
  func.func @transform_14(%arg0: i32) -> (i32, i32) {
    %c0_i32 = arith.constant 0 : i32
    %c0_i32_0 = arith.constant 0 : i32
    return %arg0, %c0_i32 : i32, i32
  }
}

</mosaic_0001>

<llo_original>
// kernel: tpu_custom_call.1
$region0: #{tpu_custom_call.1}
  #allocation0 [shape = 'u32[]', space=smem, size = 0x4, offset = 0x4, fixed_abs, tag = 'smem constant byte address 0x4 - core index']
  #allocation1 [shape = 'u32[144,128]{1,0:T(1,128)}', space=vmem, size = 0x12000, scoped, tag = 'internal scratch']
  %s0 = inlined_call_operand.hbm [shape: f32[16,32], index: 0, kind: input, shape index: {}]
  %s1 = inlined_call_operand.vmem [shape: f32[16,2], index: 1, kind: input, shape index: {}]
  %s2 = inlined_call_operand.hbm [shape: bf16[32,64], index: 2, kind: input, shape index: {}]
  %s3 = inlined_call_operand.hbm [shape: f32[1,64], index: 3, kind: input, shape index: {}]
  %s4 = inlined_call_operand.vmem [shape: f32[64,128], index: 4, kind: input, shape index: {}]
  %s5 = inlined_call_operand.hbm [shape: f32[1,128], index: 5, kind: input, shape index: {}]
  %s6 = inlined_call_operand.hbm [shape: f32[3,4], index: 6, kind: input, shape index: {}]
  %s7 = inlined_call_operand.hbm [shape: f32[1,4], index: 7, kind: input, shape index: {}]
  %s8 = inlined_call_operand.hbm [shape: f32[2,3], index: 8, kind: input, shape index: {}]
  %s9 = inlined_call_operand.hbm [shape: f32[1,3], index: 9, kind: input, shape index: {}]
  %s10 = inlined_call_operand.vmem [shape: f32[3,64], index: 10, kind: input, shape index: {}]
  %s11 = inlined_call_operand.vmem [shape: f32[1,64], index: 11, kind: input, shape index: {}]
  %s12 = inlined_call_operand.vmem [shape: bf16[64,32], index: 12, kind: input, shape index: {}]
  %s13 = inlined_call_operand.vmem [shape: f32[1,32], index: 13, kind: input, shape index: {}]
  %s14 = inlined_call_operand.hbm [shape: f32[16,128], index: 14, kind: output, shape index: {}]
  %s15 = sld [smem:[#allocation0]]
  $region121: #{tpu_custom_call.1} parent=0
    _
  %s17 = ssub.s32 1, %s15
  %s18 = scalar_select 0, %s17, %s15
  $region1: #{tpu_custom_call.1} parent=0
    #allocation2 [shape = 'u8[8192]{0}', space=vmem, size = 0x2000, scoped, tag = 'input window, operand 0']
    #allocation3 [shape = 's32[2]{0}', space=sflag, size = 0x8, scoped, tag = 'scoped memory for tpu_custom_call.1']
    #allocation4 [shape = 's32[2]{0}', space=sflag, size = 0x8, scoped, tag = 'scoped memory for tpu_custom_call.1']
    #allocation5 [shape = 'u8[8192]{0}', space=vmem, size = 0x2000, scoped, tag = 'input window, operand 2, single buffered']
    #allocation6 [shape = 's32[1]{0}', space=sflag, size = 0x4, scoped, tag = 'scoped memory for tpu_custom_call.1']
    #allocation7 [shape = 'u8[512]{0}', space=vmem, size = 0x400, scoped, tag = 'input window, operand 3, single buffered']
    #allocation8 [shape = 'u8[512]{0}', space=vmem, size = 0x400, scoped, tag = 'input window, operand 5, single buffered']
    #allocation9 [shape = 's32[1]{0}', space=sflag, size = 0x4, scoped, tag = 'scoped memory for tpu_custom_call.1']
    #allocation10 [shape = 'u8[2048]{0}', space=vmem, size = 0x800, scoped, tag = 'input window, operand 6, single buffered']
    #allocation11 [shape = 'u8[512]{0}', space=vmem, size = 0x400, scoped, tag = 'input window, operand 7, single buffered']
    #allocation12 [shape = 's32[1]{0}', space=sflag, size = 0x4, scoped, tag = 'scoped memory for tpu_custom_call.1']
    #allocation13 [shape = 'u8[1024]{0}', space=vmem, size = 0x400, scoped, tag = 'input window, operand 8, single buffered']
    #allocation14 [shape = 'u8[512]{0}', space=vmem, size = 0x400, scoped, tag = 'input window, operand 9, single buffered']
    #allocation15 [shape = 's32[1]{0}', space=sflag, size = 0x4, scoped, tag = 'scoped memory for tpu_custom_call.1']
    #allocation16 [shape = 'u8[8192]{0}', space=vmem, size = 0x2000, scoped, tag = 'output window, operand 0']
    %19 = vsyncpa [#allocation3], 0
    %s20 = scalar_lea.sflag [#allocation3], 1
    %21 = vsyncpa %s20, 0
    %22 = vsyncpa [#allocation6], 0
    %23 = vsyncpa [#allocation9], 0
    %24 = vsyncpa [#allocation12], 0
    %25 = vsyncpa [#allocation15], 0
    %26 = vsyncpa [#allocation4], 0
    %s27 = scalar_lea.sflag [#allocation4], 1
    %28 = vsyncpa %s27, 0
    loop: start=0, step=1, limit=4
    $region2: #{tpu_custom_call.1} parent=1 // loop_pre_header
      _
    $region3: #{tpu_custom_call.1} parent=1 // loop_header
      %s30 = sphi 0, %s34
      %p31 = scmp.ge.s32.totalorder %s30, 4
      %s40 = sphi 0, %s42
      %s43 = sphi 0, %s40
      %s44 = sphi 0, %s43
      %s60 = sphi 0, %s44
      %s66 = sphi 0, %s68
      %s69 = sphi 0, %s66
      %s70 = sphi 0, %s69
      %s86 = sphi 0, %s70
      %s90 = sphi 0, %s90
      %s92 = sphi 0, %s90
      %s93 = sphi 0, %s92
      %s107 = sphi 0, %s93
      %s111 = sphi 0, %s111
      %s113 = sphi 0, %s111
      %s114 = sphi 0, %s113
      %s128 = sphi 0, %s114
      %s132 = sphi 0, %s132
      %s134 = sphi 0, %s132
      %s135 = sphi 0, %s134
      %s149 = sphi 0, %s135
      %s153 = sphi 0, %s153
      %s155 = sphi 0, %s153
      %s156 = sphi 0, %s155
      %s170 = sphi 0, %s156
      %s174 = sphi 0, %s174
      %s176 = sphi 0, %s174
      %s177 = sphi 0, %s176
      %s191 = sphi 0, %s177
      %s195 = sphi 0, %s195
      %s197 = sphi 0, %s195
      %s198 = sphi 0, %s197
      %s212 = sphi 0, %s198
      %s216 = sphi 0, %s216
      %s218 = sphi 0, %s216
      %s219 = sphi 0, %s218
      %s233 = sphi 0, %s219
      %s237 = sphi 0, %s237
      %s239 = sphi 0, %s237
      %s240 = sphi 0, %s239
      %s254 = sphi 0, %s240
      %s258 = sphi 0, %s258
      %s260 = sphi 0, %s258
      %s261 = sphi 0, %s260
      %s275 = sphi 0, %s261
      %s279 = sphi 0, %s279
      %s281 = sphi 0, %s279
      %s282 = sphi 0, %s281
      %s296 = sphi 0, %s282
      %s300 = sphi 0, %s300
      %s302 = sphi 0, %s300
      %s303 = sphi 0, %s302
      %s317 = sphi 0, %s303
      %s321 = sphi 0, %s321
      %s323 = sphi 0, %s321
      %s324 = sphi 0, %s323
      %s338 = sphi 0, %s324
      %s344 = sphi 0, %s346
      %s347 = sphi 0, %s344
      %s348 = sphi 0, %s347
      %s364 = sphi 0, %s348
    $region4: #{tpu_custom_call.1} parent=1 // loop_header_branch
      %33 = sbr.rel (%p31) target = $region8
    $region5: #{tpu_custom_call.1} parent=1 // loop_body
      %s35 = ssub.s32 %s30, 1
      %s36 = ssub.s32 %s30, 2
      %s37 = sadd.s32 %s30, 1
      %s38 = ssub.s32 %s30, %s37
      %p39 = scmp.eq.s32.totalorder %s38, 0
      %s41 = sadd.s32 %s40, 1
      %s42 = scalar_select %p39, %s40, %s41
      %p45 = pneg %p39
      %p46 = scmp.eq.s32.totalorder %s30, 1
      %p47 = por %p45, %p46
      %p48 = scmp.ne.s32.totalorder %s40, %s43
      %p49 = scmp.eq.s32.totalorder %s30, 0
      %p50 = por %p48, %p49
      %p51 = scmp.ne.s32.totalorder %s40, %s43
      %p52 = scmp.eq.s32.totalorder %s35, 1
      %p53 = por %p51, %p52
      %p54 = scmp.ne.s32.totalorder %s43, %s44
      %p55 = scmp.eq.s32.totalorder %s35, 0
      %p56 = por %p54, %p55
      %p57 = scmp.ne.s32.totalorder %s43, %s44
      %p58 = scmp.eq.s32.totalorder %s36, 1
      %p59 = por %p57, %p58
      %p61 = scmp.ne.s32.totalorder %s44, %s60
      %p62 = scmp.eq.s32.totalorder %s36, 0
      %p63 = por %p61, %p62
      %s64 = ssub.s32 %s30, %s37
      %p65 = scmp.eq.s32.totalorder %s64, 0
      %s67 = sadd.s32 %s66, 1
      %s68 = scalar_select %p65, %s66, %s67
      %p71 = pneg %p65
      %p72 = scmp.eq.s32.totalorder %s30, 1
      %p73 = por %p71, %p72
      %p74 = scmp.ne.s32.totalorder %s66, %s69
      %p75 = scmp.eq.s32.totalorder %s30, 0
      %p76 = por %p74, %p75
      %p77 = scmp.ne.s32.totalorder %s66, %s69
      %p78 = scmp.eq.s32.totalorder %s35, 1
      %p79 = por %p77, %p78
      %p80 = scmp.ne.s32.totalorder %s69, %s70
      %p81 = scmp.eq.s32.totalorder %s35, 0
      %p82 = por %p80, %p81
      %p83 = scmp.ne.s32.totalorder %s69, %s70
      %p84 = scmp.eq.s32.totalorder %s36, 1
      %p85 = por %p83, %p84
      %p87 = scmp.ne.s32.totalorder %s70, %s86
      %p88 = scmp.eq.s32.totalorder %s36, 0
      %p89 = por %p87, %p88
      %s91 = sadd.s32 %s90, 1
      %p94 = scmp.eq.s32.totalorder %s30, 1
      %p95 = scmp.ne.s32.totalorder %s90, %s92
      %p96 = scmp.eq.s32.totalorder %s30, 0
      %p97 = por %p95, %p96
      %p98 = scmp.ne.s32.totalorder %s90, %s92
      %p99 = scmp.eq.s32.totalorder %s35, 1
      %p100 = por %p98, %p99
      %p101 = scmp.ne.s32.totalorder %s92, %s93
      %p102 = scmp.eq.s32.totalorder %s35, 0
      %p103 = por %p101, %p102
      %p104 = scmp.ne.s32.totalorder %s92, %s93
      %p105 = scmp.eq.s32.totalorder %s36, 1
      %p106 = por %p104, %p105
      %p108 = scmp.ne.s32.totalorder %s93, %s107
      %p109 = scmp.eq.s32.totalorder %s36, 0
      %p110 = por %p108, %p109
      %s112 = sadd.s32 %s111, 1
      %p115 = scmp.eq.s32.totalorder %s30, 1
      %p116 = scmp.ne.s32.totalorder %s111, %s113
      %p117 = scmp.eq.s32.totalorder %s30, 0
      %p118 = por %p116, %p117
      %p119 = scmp.ne.s32.totalorder %s111, %s113
      %p120 = scmp.eq.s32.totalorder %s35, 1
      %p121 = por %p119, %p120
      %p122 = scmp.ne.s32.totalorder %s113, %s114
      %p123 = scmp.eq.s32.totalorder %s35, 0
      %p124 = por %p122, %p123
      %p125 = scmp.ne.s32.totalorder %s113, %s114
      %p126 = scmp.eq.s32.totalorder %s36, 1
      %p127 = por %p125, %p126
      %p129 = scmp.ne.s32.totalorder %s114, %s128
      %p130 = scmp.eq.s32.totalorder %s36, 0
      %p131 = por %p129, %p130
      %s133 = sadd.s32 %s132, 1
      %p136 = scmp.eq.s32.totalorder %s30, 1
      %p137 = scmp.ne.s32.totalorder %s132, %s134
      %p138 = scmp.eq.s32.totalorder %s30, 0
      %p139 = por %p137, %p138
      %p140 = scmp.ne.s32.totalorder %s132, %s134
      %p141 = scmp.eq.s32.totalorder %s35, 1
      %p142 = por %p140, %p141
      %p143 = scmp.ne.s32.totalorder %s134, %s135
      %p144 = scmp.eq.s32.totalorder %s35, 0
      %p145 = por %p143, %p144
      %p146 = scmp.ne.s32.totalorder %s134, %s135
      %p147 = scmp.eq.s32.totalorder %s36, 1
      %p148 = por %p146, %p147
      %p150 = scmp.ne.s32.totalorder %s135, %s149
      %p151 = scmp.eq.s32.totalorder %s36, 0
      %p152 = por %p150, %p151
      %s154 = sadd.s32 %s153, 1
      %p157 = scmp.eq.s32.totalorder %s30, 1
      %p158 = scmp.ne.s32.totalorder %s153, %s155
      %p159 = scmp.eq.s32.totalorder %s30, 0
      %p160 = por %p158, %p159
      %p161 = scmp.ne.s32.totalorder %s153, %s155
      %p162 = scmp.eq.s32.totalorder %s35, 1
      %p163 = por %p161, %p162
      %p164 = scmp.ne.s32.totalorder %s155, %s156
      %p165 = scmp.eq.s32.totalorder %s35, 0
      %p166 = por %p164, %p165
      %p167 = scmp.ne.s32.totalorder %s155, %s156
      %p168 = scmp.eq.s32.totalorder %s36, 1
      %p169 = por %p167, %p168
      %p171 = scmp.ne.s32.totalorder %s156, %s170
      %p172 = scmp.eq.s32.totalorder %s36, 0
      %p173 = por %p171, %p172
      %s175 = sadd.s32 %s174, 1
      %p178 = scmp.eq.s32.totalorder %s30, 1
      %p179 = scmp.ne.s32.totalorder %s174, %s176
      %p180 = scmp.eq.s32.totalorder %s30, 0
      %p181 = por %p179, %p180
      %p182 = scmp.ne.s32.totalorder %s174, %s176
      %p183 = scmp.eq.s32.totalorder %s35, 1
      %p184 = por %p182, %p183
      %p185 = scmp.ne.s32.totalorder %s176, %s177
      %p186 = scmp.eq.s32.totalorder %s35, 0
      %p187 = por %p185, %p186
      %p188 = scmp.ne.s32.totalorder %s176, %s177
      %p189 = scmp.eq.s32.totalorder %s36, 1
      %p190 = por %p188, %p189
      %p192 = scmp.ne.s32.totalorder %s177, %s191
      %p193 = scmp.eq.s32.totalorder %s36, 0
      %p194 = por %p192, %p193
      %s196 = sadd.s32 %s195, 1
      %p199 = scmp.eq.s32.totalorder %s30, 1
      %p200 = scmp.ne.s32.totalorder %s195, %s197
      %p201 = scmp.eq.s32.totalorder %s30, 0
      %p202 = por %p200, %p201
      %p203 = scmp.ne.s32.totalorder %s195, %s197
      %p204 = scmp.eq.s32.totalorder %s35, 1
      %p205 = por %p203, %p204
      %p206 = scmp.ne.s32.totalorder %s197, %s198
      %p207 = scmp.eq.s32.totalorder %s35, 0
      %p208 = por %p206, %p207
      %p209 = scmp.ne.s32.totalorder %s197, %s198
      %p210 = scmp.eq.s32.totalorder %s36, 1
      %p211 = por %p209, %p210
      %p213 = scmp.ne.s32.totalorder %s198, %s212
      %p214 = scmp.eq.s32.totalorder %s36, 0
      %p215 = por %p213, %p214
      %s217 = sadd.s32 %s216, 1
      %p220 = scmp.eq.s32.totalorder %s30, 1
      %p221 = scmp.ne.s32.totalorder %s216, %s218
      %p222 = scmp.eq.s32.totalorder %s30, 0
      %p223 = por %p221, %p222
      %p224 = scmp.ne.s32.totalorder %s216, %s218
      %p225 = scmp.eq.s32.totalorder %s35, 1
      %p226 = por %p224, %p225
      %p227 = scmp.ne.s32.totalorder %s218, %s219
      %p228 = scmp.eq.s32.totalorder %s35, 0
      %p229 = por %p227, %p228
      %p230 = scmp.ne.s32.totalorder %s218, %s219
      %p231 = scmp.eq.s32.totalorder %s36, 1
      %p232 = por %p230, %p231
      %p234 = scmp.ne.s32.totalorder %s219, %s233
      %p235 = scmp.eq.s32.totalorder %s36, 0
      %p236 = por %p234, %p235
      %s238 = sadd.s32 %s237, 1
      %p241 = scmp.eq.s32.totalorder %s30, 1
      %p242 = scmp.ne.s32.totalorder %s237, %s239
      %p243 = scmp.eq.s32.totalorder %s30, 0
      %p244 = por %p242, %p243
      %p245 = scmp.ne.s32.totalorder %s237, %s239
      %p246 = scmp.eq.s32.totalorder %s35, 1
      %p247 = por %p245, %p246
      %p248 = scmp.ne.s32.totalorder %s239, %s240
      %p249 = scmp.eq.s32.totalorder %s35, 0
      %p250 = por %p248, %p249
      %p251 = scmp.ne.s32.totalorder %s239, %s240
      %p252 = scmp.eq.s32.totalorder %s36, 1
      %p253 = por %p251, %p252
      %p255 = scmp.ne.s32.totalorder %s240, %s254
      %p256 = scmp.eq.s32.totalorder %s36, 0
      %p257 = por %p255, %p256
      %s259 = sadd.s32 %s258, 1
      %p262 = scmp.eq.s32.totalorder %s30, 1
      %p263 = scmp.ne.s32.totalorder %s258, %s260
      %p264 = scmp.eq.s32.totalorder %s30, 0
      %p265 = por %p263, %p264
      %p266 = scmp.ne.s32.totalorder %s258, %s260
      %p267 = scmp.eq.s32.totalorder %s35, 1
      %p268 = por %p266, %p267
      %p269 = scmp.ne.s32.totalorder %s260, %s261
      %p270 = scmp.eq.s32.totalorder %s35, 0
      %p271 = por %p269, %p270
      %p272 = scmp.ne.s32.totalorder %s260, %s261
      %p273 = scmp.eq.s32.totalorder %s36, 1
      %p274 = por %p272, %p273
      %p276 = scmp.ne.s32.totalorder %s261, %s275
      %p277 = scmp.eq.s32.totalorder %s36, 0
      %p278 = por %p276, %p277
      %s280 = sadd.s32 %s279, 1
      %p283 = scmp.eq.s32.totalorder %s30, 1
      %p284 = scmp.ne.s32.totalorder %s279, %s281
      %p285 = scmp.eq.s32.totalorder %s30, 0
      %p286 = por %p284, %p285
      %p287 = scmp.ne.s32.totalorder %s279, %s281
      %p288 = scmp.eq.s32.totalorder %s35, 1
      %p289 = por %p287, %p288
      %p290 = scmp.ne.s32.totalorder %s281, %s282
      %p291 = scmp.eq.s32.totalorder %s35, 0
      %p292 = por %p290, %p291
      %p293 = scmp.ne.s32.totalorder %s281, %s282
      %p294 = scmp.eq.s32.totalorder %s36, 1
      %p295 = por %p293, %p294
      %p297 = scmp.ne.s32.totalorder %s282, %s296
      %p298 = scmp.eq.s32.totalorder %s36, 0
      %p299 = por %p297, %p298
      %s301 = sadd.s32 %s300, 1
      %p304 = scmp.eq.s32.totalorder %s30, 1
      %p305 = scmp.ne.s32.totalorder %s300, %s302
      %p306 = scmp.eq.s32.totalorder %s30, 0
      %p307 = por %p305, %p306
      %p308 = scmp.ne.s32.totalorder %s300, %s302
      %p309 = scmp.eq.s32.totalorder %s35, 1
      %p310 = por %p308, %p309
      %p311 = scmp.ne.s32.totalorder %s302, %s303
      %p312 = scmp.eq.s32.totalorder %s35, 0
      %p313 = por %p311, %p312
      %p314 = scmp.ne.s32.totalorder %s302, %s303
      %p315 = scmp.eq.s32.totalorder %s36, 1
      %p316 = por %p314, %p315
      %p318 = scmp.ne.s32.totalorder %s303, %s317
      %p319 = scmp.eq.s32.totalorder %s36, 0
      %p320 = por %p318, %p319
      %s322 = sadd.s32 %s321, 1
      %p325 = scmp.eq.s32.totalorder %s30, 1
      %p326 = scmp.ne.s32.totalorder %s321, %s323
      %p327 = scmp.eq.s32.totalorder %s30, 0
      %p328 = por %p326, %p327
      %p329 = scmp.ne.s32.totalorder %s321, %s323
      %p330 = scmp.eq.s32.totalorder %s35, 1
      %p331 = por %p329, %p330
      %p332 = scmp.ne.s32.totalorder %s323, %s324
      %p333 = scmp.eq.s32.totalorder %s35, 0
      %p334 = por %p332, %p333
      %p335 = scmp.ne.s32.totalorder %s323, %s324
      %p336 = scmp.eq.s32.totalorder %s36, 1
      %p337 = por %p335, %p336
      %p339 = scmp.ne.s32.totalorder %s324, %s338
      %p340 = scmp.eq.s32.totalorder %s36, 0
      %p341 = por %p339, %p340
      %s342 = ssub.s32 %s30, %s37
      %p343 = scmp.eq.s32.totalorder %s342, 0
      %s345 = sadd.s32 %s344, 1
      %s346 = scalar_select %p343, %s344, %s345
      %p349 = pneg %p343
      %p350 = scmp.eq.s32.totalorder %s30, 1
      %p351 = por %p349, %p350
      %p352 = scmp.ne.s32.totalorder %s344, %s347
      %p353 = scmp.eq.s32.totalorder %s30, 0
      %p354 = por %p352, %p353
      %p355 = scmp.ne.s32.totalorder %s344, %s347
      %p356 = scmp.eq.s32.totalorder %s35, 1
      %p357 = por %p355, %p356
      %p358 = scmp.ne.s32.totalorder %s347, %s348
      %p359 = scmp.eq.s32.totalorder %s35, 0
      %p360 = por %p358, %p359
      %p361 = scmp.ne.s32.totalorder %s347, %s348
      %p362 = scmp.eq.s32.totalorder %s36, 1
      %p363 = por %p361, %p362
      %p365 = scmp.ne.s32.totalorder %s348, %s364
      %p366 = scmp.eq.s32.totalorder %s36, 0
      %p367 = por %p365, %p366
      %p368 = scmp.le.s32.totalorder 1, %s30
      %p369 = scmp.lt.s32.totalorder %s30, 3
      %p370 = pnand %p368, %p369
      %p371 = pneg %p370
      // Predicated region
      $region9: #{tpu_custom_call.1} parent=5 // pred_check
        _
      $region10: #{tpu_custom_call.1} parent=5 // pred_check_branch
        %373 = sbr.rel (%p370) target = $region12
      $region11: #{tpu_custom_call.1} parent=5 // pred_region
        %s374 = ssub.s32 %s30, 1
        // Predicated region
        $region13: #{tpu_custom_call.1} parent=11 // pred_check
          %p375 = pneg %p103
        $region14: #{tpu_custom_call.1} parent=11 // pred_check_branch
          %377 = sbr.rel (%p375) target = $region16
        $region15: #{tpu_custom_call.1} parent=11 // pred_region
          %s379 = ssub.s32 256, 256
          %380 = vsyncadd [#allocation6], %s379
          %s381 = sshll.u32 [#allocation5], 4
          %s382 = int_to_ptr.vmem [resolvable:$true] %s381
          %387 = dma.hbm_to_vmem [thread:$0]  %s2, 256, %s382, [#allocation6], 64, 64, 4
        $region16: #{tpu_custom_call.1} parent=11 // pred_fallthru
          _
        // Predicated region
        $region17: #{tpu_custom_call.1} parent=11 // pred_check
          %p388 = pneg %p124
        $region18: #{tpu_custom_call.1} parent=11 // pred_check_branch
          %390 = sbr.rel (%p388) target = $region20
        $region19: #{tpu_custom_call.1} parent=11 // pred_region
          %s392 = ssub.s32 16, 16
          %393 = vsyncadd [#allocation6], %s392
          %s395 = sshll.u32 [#allocation7], 4
          %s396 = int_to_ptr.vmem [resolvable:$true] %s395
          %398 = dma.hbm_to_vmem [thread:$0]  %s3, 16, %s396, [#allocation6]
        $region20: #{tpu_custom_call.1} parent=11 // pred_fallthru
          _
        // Predicated region
        $region21: #{tpu_custom_call.1} parent=11 // pred_check
          %p399 = pneg %p145
        $region22: #{tpu_custom_call.1} parent=11 // pred_check_branch
          %401 = sbr.rel (%p399) target = $region24
        $region23: #{tpu_custom_call.1} parent=11 // pred_region
          _
        $region24: #{tpu_custom_call.1} parent=11 // pred_fallthru
          _
        // Predicated region
        $region25: #{tpu_custom_call.1} parent=11 // pred_check
          %p402 = pneg %p166
        $region26: #{tpu_custom_call.1} parent=11 // pred_check_branch
          %404 = sbr.rel (%p402) target = $region28
        $region27: #{tpu_custom_call.1} parent=11 // pred_region
          %s406 = ssub.s32 16, 16
          %407 = vsyncadd [#allocation9], %s406
          %s409 = sshll.u32 [#allocation8], 4
          %s410 = int_to_ptr.vmem [resolvable:$true] %s409
          %412 = dma.hbm_to_vmem [thread:$0]  %s5, 16, %s410, [#allocation9]
        $region28: #{tpu_custom_call.1} parent=11 // pred_fallthru
          _
        // Predicated region
        $region29: #{tpu_custom_call.1} parent=11 // pred_check
          %p413 = pneg %p187
        $region30: #{tpu_custom_call.1} parent=11 // pred_check_branch
          %415 = sbr.rel (%p413) target = $region32
        $region31: #{tpu_custom_call.1} parent=11 // pred_region
          %s417 = ssub.s32 64, 64
          %418 = vsyncadd [#allocation9], %s417
          %s420 = sshll.u32 [#allocation10], 4
          %s421 = int_to_ptr.vmem [resolvable:$true] %s420
          %423 = dma.hbm_to_vmem [thread:$0]  %s6, 64, %s421, [#allocation9]
        $region32: #{tpu_custom_call.1} parent=11 // pred_fallthru
          _
        // Predicated region
        $region33: #{tpu_custom_call.1} parent=11 // pred_check
          %p424 = pneg %p208
        $region34: #{tpu_custom_call.1} parent=11 // pred_check_branch
          %426 = sbr.rel (%p424) target = $region36
        $region35: #{tpu_custom_call.1} parent=11 // pred_region
          %s428 = ssub.s32 16, 16
          %429 = vsyncadd [#allocation12], %s428
          %s431 = sshll.u32 [#allocation11], 4
          %s432 = int_to_ptr.vmem [resolvable:$true] %s431
          %434 = dma.hbm_to_vmem [thread:$0]  %s7, 16, %s432, [#allocation12]
        $region36: #{tpu_custom_call.1} parent=11 // pred_fallthru
          _
        // Predicated region
        $region37: #{tpu_custom_call.1} parent=11 // pred_check
          %p435 = pneg %p229
        $region38: #{tpu_custom_call.1} parent=11 // pred_check_branch
          %437 = sbr.rel (%p435) target = $region40
        $region39: #{tpu_custom_call.1} parent=11 // pred_region
          %s439 = ssub.s32 32, 32
          %440 = vsyncadd [#allocation12], %s439
          %s442 = sshll.u32 [#allocation13], 4
          %s443 = int_to_ptr.vmem [resolvable:$true] %s442
          %445 = dma.hbm_to_vmem [thread:$0]  %s8, 32, %s443, [#allocation12]
        $region40: #{tpu_custom_call.1} parent=11 // pred_fallthru
          _
        // Predicated region
        $region41: #{tpu_custom_call.1} parent=11 // pred_check
          %p446 = pneg %p250
        $region42: #{tpu_custom_call.1} parent=11 // pred_check_branch
          %448 = sbr.rel (%p446) target = $region44
        $region43: #{tpu_custom_call.1} parent=11 // pred_region
          %s450 = ssub.s32 16, 16
          %451 = vsyncadd [#allocation15], %s450
          %s453 = sshll.u32 [#allocation14], 4
          %s454 = int_to_ptr.vmem [resolvable:$true] %s453
          %456 = dma.hbm_to_vmem [thread:$0]  %s9, 16, %s454, [#allocation15]
        $region44: #{tpu_custom_call.1} parent=11 // pred_fallthru
          _
        // Predicated region
        $region45: #{tpu_custom_call.1} parent=11 // pred_check
          %p457 = pneg %p271
        $region46: #{tpu_custom_call.1} parent=11 // pred_check_branch
          %459 = sbr.rel (%p457) target = $region48
        $region47: #{tpu_custom_call.1} parent=11 // pred_region
          _
        $region48: #{tpu_custom_call.1} parent=11 // pred_fallthru
          _
        // Predicated region
        $region49: #{tpu_custom_call.1} parent=11 // pred_check
          %p460 = pneg %p292
        $region50: #{tpu_custom_call.1} parent=11 // pred_check_branch
          %462 = sbr.rel (%p460) target = $region52
        $region51: #{tpu_custom_call.1} parent=11 // pred_region
          _
        $region52: #{tpu_custom_call.1} parent=11 // pred_fallthru
          _
        // Predicated region
        $region53: #{tpu_custom_call.1} parent=11 // pred_check
          %p463 = pneg %p313
        $region54: #{tpu_custom_call.1} parent=11 // pred_check_branch
          %465 = sbr.rel (%p463) target = $region56
        $region55: #{tpu_custom_call.1} parent=11 // pred_region
          _
        $region56: #{tpu_custom_call.1} parent=11 // pred_fallthru
          _
        // Predicated region
        $region57: #{tpu_custom_call.1} parent=11 // pred_check
          %p466 = pneg %p334
        $region58: #{tpu_custom_call.1} parent=11 // pred_check_branch
          %468 = sbr.rel (%p466) target = $region60
        $region59: #{tpu_custom_call.1} parent=11 // pred_region
          _
        $region60: #{tpu_custom_call.1} parent=11 // pred_fallthru
          _
      $region12: #{tpu_custom_call.1} parent=5 // pred_fallthru
        _
      %p469 = scmp.lt.s32.totalorder %s30, 2
      // Predicated region
      $region61: #{tpu_custom_call.1} parent=5 // pred_check
        %p470 = pneg %p469
      $region62: #{tpu_custom_call.1} parent=5 // pred_check_branch
        %472 = sbr.rel (%p470) target = $region64
      $region63: #{tpu_custom_call.1} parent=5 // pred_region
        // Predicated region
        $region65: #{tpu_custom_call.1} parent=63 // pred_check
          %p473 = pneg %p50
        $region66: #{tpu_custom_call.1} parent=63 // pred_check_branch
          %475 = sbr.rel (%p473) target = $region68
        $region67: #{tpu_custom_call.1} parent=63 // pred_region
          %s476 = sand.u32 %s40, 1
          %s477 = scalar_lea.sflag [#allocation3], %s476
          %s478 = sand.u32 %s40, 1
          %s479 = smul.addr %s478, 8
          %s480 = scalar_lea.vmem [#allocation2], %s479
          %s482 = ssub.s32 128, 128
          %483 = vsyncadd %s477, %s482
          %s484 = smul.addr %s30, 128
          %s485 = scalar_lea.hbm %s0, %s484
          %s487 = sshll.u32 %s480, 4
          %s488 = int_to_ptr.vmem [resolvable:$true] %s487
          %490 = dma.hbm_to_vmem [thread:$0]  %s485, 128, %s488, %s477
        $region68: #{tpu_custom_call.1} parent=63 // pred_fallthru
          _
        // Predicated region
        $region69: #{tpu_custom_call.1} parent=63 // pred_check
          %p491 = pneg %p76
        $region70: #{tpu_custom_call.1} parent=63 // pred_check_branch
          %493 = sbr.rel (%p491) target = $region72
        $region71: #{tpu_custom_call.1} parent=63 // pred_region
          %p494 = scmp.lt.s32.totalorder %s30, 1
          %s495 = scalar_select %p494, %s30, 1
          %s496 = smul.addr %s495, 8
          %s497 = scalar_lea.vmem %s1, %s496
        $region72: #{tpu_custom_call.1} parent=63 // pred_fallthru
          _
      $region64: #{tpu_custom_call.1} parent=5 // pred_fallthru
        _
      %p498 = scmp.le.s32.totalorder 1, %s30
      %p499 = scmp.lt.s32.totalorder %s30, 3
      %p500 = pnand %p498, %p499
      %p501 = pneg %p500
      // Predicated region
      $region73: #{tpu_custom_call.1} parent=5 // pred_check
        _
      $region74: #{tpu_custom_call.1} parent=5 // pred_check_branch
        %503 = sbr.rel (%p500) target = $region76
      $region75: #{tpu_custom_call.1} parent=5 // pred_region
        %s504 = ssub.s32 %s30, 1
        %s505 = sand.u32 %s43, 1
        %s506 = scalar_lea.sflag [#allocation3], %s505
        %s507 = sand.u32 %s43, 1
        %s508 = smul.addr %s507, 8
        %s509 = scalar_lea.vmem [#allocation2], %s508
        // Predicated region
        $region77: #{tpu_custom_call.1} parent=75 // pred_check
          %p510 = pneg %p56
        $region78: #{tpu_custom_call.1} parent=75 // pred_check_branch
          %512 = sbr.rel (%p510) target = $region80
        $region79: #{tpu_custom_call.1} parent=75 // pred_region
          %513 = dma.done %s506, 128
        $region80: #{tpu_custom_call.1} parent=75 // pred_fallthru
          _
        // Predicated region
        $region81: #{tpu_custom_call.1} parent=75 // pred_check
          %p514 = pneg %p103
        $region82: #{tpu_custom_call.1} parent=75 // pred_check_branch
          %516 = sbr.rel (%p514) target = $region84
        $region83: #{tpu_custom_call.1} parent=75 // pred_region
          %517 = dma.done [#allocation6], 256
        $region84: #{tpu_custom_call.1} parent=75 // pred_fallthru
          _
        // Predicated region
        $region85: #{tpu_custom_call.1} parent=75 // pred_check
          %p518 = pneg %p124
        $region86: #{tpu_custom_call.1} parent=75 // pred_check_branch
          %520 = sbr.rel (%p518) target = $region88
        $region87: #{tpu_custom_call.1} parent=75 // pred_region
          %521 = dma.done [#allocation6], 16
        $region88: #{tpu_custom_call.1} parent=75 // pred_fallthru
          _
        // Predicated region
        $region89: #{tpu_custom_call.1} parent=75 // pred_check
          %p522 = pneg %p166
        $region90: #{tpu_custom_call.1} parent=75 // pred_check_branch
          %524 = sbr.rel (%p522) target = $region92
        $region91: #{tpu_custom_call.1} parent=75 // pred_region
          %525 = dma.done [#allocation9], 16
        $region92: #{tpu_custom_call.1} parent=75 // pred_fallthru
          _
        // Predicated region
        $region93: #{tpu_custom_call.1} parent=75 // pred_check
          %p526 = pneg %p187
        $region94: #{tpu_custom_call.1} parent=75 // pred_check_branch
          %528 = sbr.rel (%p526) target = $region96
        $region95: #{tpu_custom_call.1} parent=75 // pred_region
          %529 = dma.done [#allocation9], 64
        $region96: #{tpu_custom_call.1} parent=75 // pred_fallthru
          _
        // Predicated region
        $region97: #{tpu_custom_call.1} parent=75 // pred_check
          %p530 = pneg %p208
        $region98: #{tpu_custom_call.1} parent=75 // pred_check_branch
          %532 = sbr.rel (%p530) target = $region100
        $region99: #{tpu_custom_call.1} parent=75 // pred_region
          %533 = dma.done [#allocation12], 16
        $region100: #{tpu_custom_call.1} parent=75 // pred_fallthru
          _
        // Predicated region
        $region101: #{tpu_custom_call.1} parent=75 // pred_check
          %p534 = pneg %p229
        $region102: #{tpu_custom_call.1} parent=75 // pred_check_branch
          %536 = sbr.rel (%p534) target = $region104
        $region103: #{tpu_custom_call.1} parent=75 // pred_region
          %537 = dma.done [#allocation12], 32
        $region104: #{tpu_custom_call.1} parent=75 // pred_fallthru
          _
        // Predicated region
        $region105: #{tpu_custom_call.1} parent=75 // pred_check
          %p538 = pneg %p250
        $region106: #{tpu_custom_call.1} parent=75 // pred_check_branch
          %540 = sbr.rel (%p538) target = $region108
        $region107: #{tpu_custom_call.1} parent=75 // pred_region
          %541 = dma.done [#allocation15], 16
        $region108: #{tpu_custom_call.1} parent=75 // pred_fallthru
          _
        %s542 = sand.u32 %s43, 1
        %s543 = scalar_lea.sflag [#allocation3], %s542
        %s544 = sand.u32 %s43, 1
        %s545 = smul.addr %s544, 8
        %s546 = scalar_lea.vmem [#allocation2], %s545
        %p547 = pneg %p56
        %p548 = pneg %p53
        %p549 = scmp.lt.s32.totalorder %s35, 1
        %s550 = scalar_select %p549, %s35, 1
        %s551 = smul.addr %s550, 8
        %s552 = scalar_lea.vmem %s1, %s551
        %p553 = pneg %p82
        %p554 = pneg %p79
        %p555 = pneg %p103
        %p556 = pneg %p100
        %p557 = pneg %p124
        %p558 = pneg %p121
        %p559 = pneg %p145
        %p560 = pneg %p142
        %p561 = pneg %p166
        %p562 = pneg %p163
        %p563 = pneg %p187
        %p564 = pneg %p184
        %p565 = pneg %p208
        %p566 = pneg %p205
        %p567 = pneg %p229
        %p568 = pneg %p226
        %p569 = pneg %p250
        %p570 = pneg %p247
        %p571 = pneg %p271
        %p572 = pneg %p268
        %p573 = pneg %p292
        %p574 = pneg %p289
        %p575 = pneg %p313
        %p576 = pneg %p310
        %p577 = pneg %p334
        %p578 = pneg %p331
        %p579 = pneg %p360
        %p580 = pneg %p357
        %s581 = sand.u32 %s347, 1
        %s582 = scalar_lea.sflag [#allocation4], %s581
        %s583 = sand.u32 %s347, 1
        %s584 = smul.addr %s583, 8
        %s585 = scalar_lea.vmem [#allocation16], %s584
        %p586 = scmp.lt.s32.totalorder %s35, 1
        %s587 = scalar_select %p586, %s35, 1
        %s588 = smul.addr %s587, 8
        %s589 = scalar_lea.vmem %s1, %s588
        %v591 = vld [vmem:[%s509] sm:$0xff]
        %v592 = vpack.c.bf16 %v591, %v591
        %v593 = vld [vmem:[#allocation5] sm:$0xf]
        %v594 = vld [vmem:[#allocation5 + $0x4] sm:$0xf]
        %v595 = vld [vmem:[#allocation5 + $0x8] sm:$0xf]
        %v596 = vld [vmem:[#allocation5 + $0xc] sm:$0xf]
        %v597 = vld [vmem:[#allocation7] sm:$0x1]
        %v599 = vlaneseq
        %v600 = vshrl.u32 %v599, 7
        %v601 = vsub.s32 0, %v600
        %v602 = vrot.slane %v597, %v601
        %v608 = vunpack.c.l.b16 %v593
        %v609 = vunpack.c.l.b16 %v594
        %v610 = vunpack.c.l.b16 %v595
        %v611 = vunpack.c.l.b16 %v596
        %v612 = vpack.c.b16 %v609, %v608
        %v613 = vpack.c.b16 %v611, %v610
        %vm616 = vcmask 261120
        %v618 = vsel %vm616, %v592, 0
        %620 = vmatprep.subr.bf16.mxu0 0
        %621 = vmatpush1.bf16.msra.mxu0 0
        %622 = vmatprep.subr.bf16.mxu0 0
        %623 = vmatpush1.bf16.msra.mxu0 0
        %624 = vmatprep.subr.bf16.mxu0 0
        %625 = vmatpush1.bf16.msra.mxu0 0
        %626 = vmatprep.subr.bf16.mxu0 0
        %627 = vmatpush1.bf16.msra.mxu0 0
        %628 = vmatprep.subr.bf16.mxu0 0
        %629 = vmatpush1.bf16.msra.mxu0 0
        %630 = vmatprep.subr.bf16.mxu0 0
        %631 = vmatpush1.bf16.msra.mxu0 0
        %632 = vmatprep.subr.bf16.mxu0 0
        %633 = vmatpush1.bf16.msra.mxu0 %v613
        %634 = vmatprep.subr.bf16.mxu0 0
        %635 = vmatpush1.bf16.msra.mxu0 %v612
        %636 = vmatprep.subr.bf16.mxu0 0
        %637 = vmatpush2.bf16.msra.mxu0 0
        %638 = vmatprep.subr.bf16.mxu0 0
        %639 = vmatpush2.bf16.msra.mxu0 0
        %640 = vmatprep.subr.bf16.mxu0 0
        %641 = vmatpush2.bf16.msra.mxu0 0
        %642 = vmatprep.subr.bf16.mxu0 0
        %643 = vmatpush2.bf16.msra.mxu0 0
        %644 = vmatprep.subr.bf16.mxu0 0
        %645 = vmatpush2.bf16.msra.mxu0 0
        %646 = vmatprep.subr.bf16.mxu0 0
        %647 = vmatpush2.bf16.msra.mxu0 0
        %648 = vmatprep.subr.bf16.mxu0 0
        %649 = vmatpush2.bf16.msra.mxu0 0
        %650 = vmatprep.subr.bf16.mxu0 0
        %651 = vmatpush2.bf16.msra.mxu0 0
        %652 = vmatprep.mubr.bf16.mxu0 0
        %653 = vmatmul.mubr.bf16.gmra.mxu0 %v618
        %v654 = vpop.f32.mrf.mxu0
        %v655 = vadd.f32 %v602, %v654
        %v656 = vpop.f32.mrf.mxu0
        %v657 = vpop.f32.mrf.mxu0
        %v658 = vpop.f32.mrf.mxu0
        %659 = vdwg.mxu0
        %vm660 = vcmp.gt.f32.partialorder %v655, 0.0
        %v661 = vmul.f32 %v655, 0.2
        %v662 = vsel %vm660, %v655, %v661
        %v663 = vld [vmem:[%s4] sm:$0xff]
        %v664 = vld [vmem:[%s4 + $0x8] sm:$0xff]
        %v665 = vld [vmem:[%s4 + $0x10] sm:$0xff]
        %v666 = vld [vmem:[%s4 + $0x18] sm:$0xff]
        %v667 = vld [vmem:[%s4 + $0x20] sm:$0xff]
        %v668 = vld [vmem:[%s4 + $0x28] sm:$0xff]
        %v669 = vld [vmem:[%s4 + $0x30] sm:$0xff]
        %v670 = vld [vmem:[%s4 + $0x38] sm:$0xff]
        %v671 = vld [vmem:[#allocation8] sm:$0x1]
        %v673 = vlaneseq
        %v674 = vshrl.u32 %v673, 7
        %v675 = vsub.s32 0, %v674
        %v676 = vrot.slane %v671, %v675
        %vm678 = vcmask 523264
        %v680 = vsel %vm678, %v662, 0
        %682 = vmatprep.subr.mxu0 0.0
        %683 = vmatpush1.msra.mxu0 0.0
        %684 = vmatprep.subr.mxu0 0.0
        %685 = vmatpush1.msra.mxu0 0.0
        %686 = vmatprep.subr.mxu0 0.0
        %687 = vmatpush1.msra.mxu0 0.0
        %688 = vmatprep.subr.mxu0 0.0
        %689 = vmatpush1.msra.mxu0 0.0
        %690 = vmatprep.subr.mxu0 0.0
        %691 = vmatpush1.msra.mxu0 0.0
        %692 = vmatprep.subr.mxu0 0.0
        %693 = vmatpush1.msra.mxu0 0.0
        %694 = vmatprep.subr.mxu0 0.0
        %695 = vmatpush1.msra.mxu0 0.0
        %696 = vmatprep.subr.mxu0 0.0
        %697 = vmatpush1.msra.mxu0 0.0
        %698 = vmatprep.subr.mxu0 0.0
        %699 = vmatpush1.msra.mxu0 %v670
        %700 = vmatprep.subr.mxu0 0.0
        %701 = vmatpush1.msra.mxu0 %v669
        %702 = vmatprep.subr.mxu0 0.0
        %703 = vmatpush1.msra.mxu0 %v668
        %704 = vmatprep.subr.mxu0 0.0
        %705 = vmatpush1.msra.mxu0 %v667
        %706 = vmatprep.subr.mxu0 0.0
        %707 = vmatpush1.msra.mxu0 %v666
        %708 = vmatprep.subr.mxu0 0.0
        %709 = vmatpush1.msra.mxu0 %v665
        %710 = vmatprep.subr.mxu0 0.0
        %711 = vmatpush1.msra.mxu0 %v664
        %712 = vmatprep.subr.mxu0 0.0
        %713 = vmatpush1.msra.mxu0 %v663
        %714 = vmatprep.subr.mxu0 0.0
        %715 = vmatpush2.msra.mxu0 0.0
        %716 = vmatprep.subr.mxu0 0.0
        %717 = vmatpush2.msra.mxu0 0.0
        %718 = vmatprep.subr.mxu0 0.0
        %719 = vmatpush2.msra.mxu0 0.0
        %720 = vmatprep.subr.mxu0 0.0
        %721 = vmatpush2.msra.mxu0 0.0
        %722 = vmatprep.subr.mxu0 0.0
        %723 = vmatpush2.msra.mxu0 0.0
        %724 = vmatprep.subr.mxu0 0.0
        %725 = vmatpush2.msra.mxu0 0.0
        %726 = vmatprep.subr.mxu0 0.0
        %727 = vmatpush2.msra.mxu0 0.0
        %728 = vmatprep.subr.mxu0 0.0
        %729 = vmatpush2.msra.mxu0 0.0
        %730 = vmatprep.subr.mxu0 0.0
        %731 = vmatpush2.msra.mxu0 0.0
        %732 = vmatprep.subr.mxu0 0.0
        %733 = vmatpush2.msra.mxu0 0.0
        %734 = vmatprep.subr.mxu0 0.0
        %735 = vmatpush2.msra.mxu0 0.0
        %736 = vmatprep.subr.mxu0 0.0
        %737 = vmatpush2.msra.mxu0 0.0
        %738 = vmatprep.subr.mxu0 0.0
        %739 = vmatpush2.msra.mxu0 0.0
        %740 = vmatprep.subr.mxu0 0.0
        %741 = vmatpush2.msra.mxu0 0.0
        %742 = vmatprep.subr.mxu0 0.0
        %743 = vmatpush2.msra.mxu0 0.0
        %744 = vmatprep.subr.mxu0 0.0
        %745 = vmatpush2.msra.mxu0 0.0
        %746 = vmatprep.mubr.f32.mxu0 0.0
        %747 = vmatmul.mubr.f32.gmra.mxu0 %v680
        %v748 = vpop.f32.mrf.mxu0
        %v749 = vadd.f32 %v676, %v748
        %v750 = vpop.f32.mrf.mxu0
        %751 = vdwg.mxu0
        %vm752 = vcmp.gt.f32.partialorder %v749, 0.0
        %v753 = vmul.f32 %v749, 0.2
        %v754 = vsel %vm752, %v749, %v753
        %v755 = vld [vmem:[#allocation10] sm:$0x7]
        %v756 = vld [vmem:[#allocation11] sm:$0x1]
        %758 = vset.pattern.permute.xlu0 0
        %759 = vperm.xlu0 %758, %v754
        %v760 = vpop.permute.xlu0 %759
        %v762 = vlaneseq
        %v763 = vshrl.u32 %v762, 7
        %v764 = vsub.s32 0, %v763
        %v765 = vrot.slane %v755, %v764
        %v766 = vmul.f32 %v760, %v765
        %v768 = vlaneseq
        %v769 = vshrl.u32 %v768, 7
        %v770 = vsub.s32 0, %v769
        %v771 = vrot.slane %v756, %v770
        %v773 = vadd.f32 %v771, %v766
        %774 = vset.pattern.permute.xlu0 1
        %775 = vperm.xlu0 %774, %v754
        %v776 = vpop.permute.xlu0 %775
        %v778 = vlaneseq
        %v779 = vshrl.u32 %v778, 7
        %v780 = vsub.s32 1, %v779
        %v781 = vrot.slane %v755, %v780
        %v782 = vmul.f32 %v776, %v781
        %v783 = vadd.f32 %v773, %v782
        %784 = vset.pattern.permute.xlu0 2
        %785 = vperm.xlu0 %784, %v754
        %v786 = vpop.permute.xlu0 %785
        %v788 = vlaneseq
        %v789 = vshrl.u32 %v788, 7
        %v790 = vsub.s32 2, %v789
        %v791 = vrot.slane %v755, %v790
        %v792 = vmul.f32 %v786, %v791
        %v793 = vadd.f32 %v783, %v792
        %v794 = vld [vmem:[%s589] sm:$0xff]
        %796 = vrot.lane.b32.xlu0 %v794, 2
        %v797 = vpop.permute.xlu0 %796
        %v799 = vmul.f32 %v793, %v797
        %801 = vrot.lane.b32.xlu0 %v799, 126
        %v802 = vpop.permute.xlu0 %801
        %v804 = vadd.f32 %v793, %v802
        %v805 = vld [vmem:[#allocation13] sm:$0x3]
        %v806 = vld [vmem:[#allocation14] sm:$0x1]
        %808 = vset.pattern.permute.xlu0 0
        %809 = vperm.xlu0 %808, %v804
        %v810 = vpop.permute.xlu0 %809
        %v812 = vlaneseq
        %v813 = vshrl.u32 %v812, 7
        %v814 = vsub.s32 0, %v813
        %v815 = vrot.slane %v805, %v814
        %v816 = vmul.f32 %v810, %v815
        %v818 = vlaneseq
        %v819 = vshrl.u32 %v818, 7
        %v820 = vsub.s32 0, %v819
        %v821 = vrot.slane %v806, %v820
        %v823 = vadd.f32 %v821, %v816
        %824 = vset.pattern.permute.xlu0 1
        %825 = vperm.xlu0 %824, %v804
        %v826 = vpop.permute.xlu0 %825
        %v828 = vlaneseq
        %v829 = vshrl.u32 %v828, 7
        %v830 = vsub.s32 1, %v829
        %v831 = vrot.slane %v805, %v830
        %v832 = vmul.f32 %v826, %v831
        %v833 = vadd.f32 %v823, %v832
        %vm834 = vcmp.gt.f32.partialorder %v833, 0.0
        %v835 = vmul.f32 %v833, 0.2
        %v836 = vsel %vm834, %v833, %v835
        %v837 = vld [vmem:[%s10] sm:$0x7]
        %v838 = vld [vmem:[%s11] sm:$0x1]
        %840 = vset.pattern.permute.xlu0 0
        %841 = vperm.xlu0 %840, %v836
        %v842 = vpop.permute.xlu0 %841
        %v844 = vlaneseq
        %v845 = vshrl.u32 %v844, 7
        %v846 = vsub.s32 0, %v845
        %v847 = vrot.slane %v837, %v846
        %v848 = vmul.f32 %v842, %v847
        %v850 = vlaneseq
        %v851 = vshrl.u32 %v850, 7
        %v852 = vsub.s32 0, %v851
        %v853 = vrot.slane %v838, %v852
        %v855 = vadd.f32 %v853, %v848
        %856 = vset.pattern.permute.xlu0 1
        %857 = vperm.xlu0 %856, %v836
        %v858 = vpop.permute.xlu0 %857
        %v860 = vlaneseq
        %v861 = vshrl.u32 %v860, 7
        %v862 = vsub.s32 1, %v861
        %v863 = vrot.slane %v837, %v862
        %v864 = vmul.f32 %v858, %v863
        %v865 = vadd.f32 %v855, %v864
        %866 = vset.pattern.permute.xlu0 2
        %867 = vperm.xlu0 %866, %v836
        %v868 = vpop.permute.xlu0 %867
        %v870 = vlaneseq
        %v871 = vshrl.u32 %v870, 7
        %v872 = vsub.s32 2, %v871
        %v873 = vrot.slane %v837, %v872
        %v874 = vmul.f32 %v868, %v873
        %v875 = vadd.f32 %v865, %v874
        %vm876 = vcmp.gt.f32.partialorder %v875, 0.0
        %v877 = vmul.f32 %v875, 0.2
        %v878 = vsel %vm876, %v875, %v877
        %v879 = vpack.c.bf16 %v878, %v878
        %v880 = vld [vmem:[%s12] sm:$0xf]
        %v881 = vld [vmem:[%s12 + $0x4] sm:$0xf]
        %v882 = vld [vmem:[%s12 + $0x8] sm:$0xf]
        %v883 = vld [vmem:[%s12 + $0xc] sm:$0xf]
        %v884 = vld [vmem:[%s12 + $0x10] sm:$0xf]
        %v885 = vld [vmem:[%s12 + $0x14] sm:$0xf]
        %v886 = vld [vmem:[%s12 + $0x18] sm:$0xf]
        %v887 = vld [vmem:[%s12 + $0x1c] sm:$0xf]
        %v888 = vld [vmem:[%s13] sm:$0x1]
        %v890 = vlaneseq
        %v891 = vshrl.u32 %v890, 7
        %v892 = vsub.s32 0, %v891
        %v893 = vrot.slane %v888, %v892
        %v903 = vunpack.c.l.b16 %v880
        %v904 = vunpack.c.l.b16 %v881
        %v905 = vunpack.c.l.b16 %v882
        %v906 = vunpack.c.l.b16 %v883
        %v907 = vunpack.c.l.b16 %v884
        %v908 = vunpack.c.l.b16 %v885
        %v909 = vunpack.c.l.b16 %v886
        %v910 = vunpack.c.l.b16 %v887
        %v911 = vpack.c.b16 %v904, %v903
        %v912 = vpack.c.b16 %v906, %v905
        %v913 = vpack.c.b16 %v908, %v907
        %v914 = vpack.c.b16 %v910, %v909
        %v920 = vsel %vm678, %v879, 0
        %922 = vmatprep.subr.bf16.mxu0 0
        %923 = vmatpush1.bf16.msra.mxu0 0
        %924 = vmatprep.subr.bf16.mxu0 0
        %925 = vmatpush1.bf16.msra.mxu0 0
        %926 = vmatprep.subr.bf16.mxu0 0
        %927 = vmatpush1.bf16.msra.mxu0 0
        %928 = vmatprep.subr.bf16.mxu0 0
        %929 = vmatpush1.bf16.msra.mxu0 0
        %930 = vmatprep.subr.bf16.mxu0 0
        %931 = vmatpush1.bf16.msra.mxu0 %v914
        %932 = vmatprep.subr.bf16.mxu0 0
        %933 = vmatpush1.bf16.msra.mxu0 %v913
        %934 = vmatprep.subr.bf16.mxu0 0
        %935 = vmatpush1.bf16.msra.mxu0 %v912
        %936 = vmatprep.subr.bf16.mxu0 0
        %937 = vmatpush1.bf16.msra.mxu0 %v911
        %938 = vmatprep.subr.bf16.mxu0 0
        %939 = vmatpush2.bf16.msra.mxu0 0
        %940 = vmatprep.subr.bf16.mxu0 0
        %941 = vmatpush2.bf16.msra.mxu0 0
        %942 = vmatprep.subr.bf16.mxu0 0
        %943 = vmatpush2.bf16.msra.mxu0 0
        %944 = vmatprep.subr.bf16.mxu0 0
        %945 = vmatpush2.bf16.msra.mxu0 0
        %946 = vmatprep.subr.bf16.mxu0 0
        %947 = vmatpush2.bf16.msra.mxu0 0
        %948 = vmatprep.subr.bf16.mxu0 0
        %949 = vmatpush2.bf16.msra.mxu0 0
        %950 = vmatprep.subr.bf16.mxu0 0
        %951 = vmatpush2.bf16.msra.mxu0 0
        %952 = vmatprep.subr.bf16.mxu0 0
        %953 = vmatpush2.bf16.msra.mxu0 0
        %954 = vmatprep.mubr.bf16.mxu0 0
        %955 = vmatmul.mubr.bf16.gmra.mxu0 %v920
        %v956 = vpop.f32.mrf.mxu0
        %v957 = vadd.f32 %v893, %v956
        %v958 = vpop.f32.mrf.mxu0
        %v959 = vpop.f32.mrf.mxu0
        %v960 = vpop.f32.mrf.mxu0
        %961 = vdwg.mxu0
        %v962 = vxor.u32 %v957, 2147483648
        %v963 = vmul.f32 %v962, 1.442695
        %v964 = vpow.pop %v963
        %v965 = vadd.f32 %v964, 1.0
        %v966 = vrcp.pop %v965
        %v967 = vmul.f32 1.0, %v966
        %968 = vst.msk [vmem:[%s585] sm:$0xff] %vm616, %v967
        %970 = vrot.lane.b32.xlu0 %v793, 32
        %v971 = vpop.permute.xlu0 %970
        %vm973 = vcmask 294144
        %974 = vst.msk [vmem:[%s585] sm:$0xff] %vm973, %v971
        %vm975 = vcmask 1047840
        %976 = vst.msk [vmem:[%s585] sm:$0xff] %vm975, 0.0
        %s977 = sand.u32 %s347, 1
        %s978 = scalar_lea.sflag [#allocation4], %s977
        %s979 = sand.u32 %s347, 1
        %s980 = smul.addr %s979, 8
        %s981 = scalar_lea.vmem [#allocation16], %s980
        // Predicated region
        $region109: #{tpu_custom_call.1} parent=75 // pred_check
          %p982 = pneg %p357
        $region110: #{tpu_custom_call.1} parent=75 // pred_check_branch
          %984 = sbr.rel (%p982) target = $region112
        $region111: #{tpu_custom_call.1} parent=75 // pred_region
          %s986 = ssub.s32 128, 128
          %987 = vsyncadd %s978, %s986
          %s988 = smul.addr %s35, 128
          %s989 = scalar_lea.hbm %s14, %s988
          %s991 = sshll.u32 %s981, 4
          %s992 = int_to_ptr.vmem [resolvable:$true] %s991
          %994 = dma.vmem_to_hbm [thread:$0]  %s992, 128, %s989, %s978
        $region112: #{tpu_custom_call.1} parent=75 // pred_fallthru
          _
      $region76: #{tpu_custom_call.1} parent=5 // pred_fallthru
        _
      %p995 = scmp.le.s32.totalorder 2, %s30
      // Predicated region
      $region113: #{tpu_custom_call.1} parent=5 // pred_check
        %p996 = pneg %p995
      $region114: #{tpu_custom_call.1} parent=5 // pred_check_branch
        %998 = sbr.rel (%p996) target = $region116
      $region115: #{tpu_custom_call.1} parent=5 // pred_region
        %s999 = ssub.s32 %s30, 2
        // Predicated region
        $region117: #{tpu_custom_call.1} parent=115 // pred_check
          %p1000 = pneg %p363
        $region118: #{tpu_custom_call.1} parent=115 // pred_check_branch
          %1002 = sbr.rel (%p1000) target = $region120
        $region119: #{tpu_custom_call.1} parent=115 // pred_region
          %s1003 = sand.u32 %s348, 1
          %s1004 = scalar_lea.sflag [#allocation4], %s1003
          %s1005 = sand.u32 %s348, 1
          %s1006 = smul.addr %s1005, 8
          %s1007 = scalar_lea.vmem [#allocation16], %s1006
          %1008 = dma.done %s1004, 128
        $region120: #{tpu_custom_call.1} parent=115 // pred_fallthru
          _
      $region116: #{tpu_custom_call.1} parent=5 // pred_fallthru
        _
    $region6: #{tpu_custom_call.1} parent=1 // loop_footer
      %s34 = sadd.s32 1, %s30
    $region7: #{tpu_custom_call.1} parent=1 // loop_footer_branch
      %29 = sbr.rel target = $region3
    $region8: #{tpu_custom_call.1} parent=1 // loop_exit
      _
    %1009 = vsyncpa [#allocation3], 1
    %s1010 = scalar_lea.sflag [#allocation3], 1
    %1011 = vsyncpa %s1010, 1
    %1012 = vsyncpa [#allocation6], 1
    %1013 = vsyncpa [#allocation9], 1
    %1014 = vsyncpa [#allocation12], 1
    %1015 = vsyncpa [#allocation15], 1
    %1016 = vsyncpa [#allocation4], 1
    %s1017 = scalar_lea.sflag [#allocation4], 1
    %1018 = vsyncpa %s1017, 1

</llo_original>
